<compile_context>
chip_gen: v5e
topology: v5e:2x2
jax: 0.10.0
libtpu: 0.0.40
codegen_flags: <defaults>
</compile_context>

<pallas_src>
import functools

import jax
import jax.numpy as jnp
from jax.experimental import pallas as pl
from jax.experimental.pallas import tpu as pltpu


def _shuffle_kernel(x_ref, p_ref, y_ref, *, precision):
    # y = x @ P  (P is a 0/1 permutation matrix, so this is an exact gather).
    y = jnp.dot(
        x_ref[...],
        p_ref[...],
        preferred_element_type=jnp.float32,
        precision=precision,
    )
    y_ref[...] = y.astype(y_ref.dtype)


def _sublane_tile(itemsize):
    # Native sublane tile: 8 rows for 4-byte, 16 for 2-byte, 32 for 1-byte.
    return max(8, 32 // max(int(itemsize), 1))


def _device_budgets():
    """(per-input-tile byte budget, vmem_limit_bytes) per TPU generation."""
    try:
        kind = jax.devices()[0].device_kind.lower()
    except Exception:  # pragma: no cover - defensive
        kind = ""
    if "v7" in kind:
        # 3.2 TB/s HBM: bigger tiles amortize the ~0.35us/step overhead, but
        # physical VMEM is only 64 MiB, so stay well inside it.
        return 6 * 1024 * 1024, 48 * 1024 * 1024
    if "v6" in kind:
        # 128 MiB physical VMEM; take larger tiles than the 32 MiB default.
        return 4 * 1024 * 1024, 64 * 1024 * 1024
    # v5e / unknown: conservative.
    return 2 * 1024 * 1024, 32 * 1024 * 1024


def _pick_block_rows(batch, feat, itemsize, budget_bytes):
    tile = _sublane_tile(itemsize)
    rows = budget_bytes // max(feat * int(itemsize), 1)
    rows = int(min(max(rows, tile), 2048))
    rows -= rows % tile
    b_aligned = ((batch + tile - 1) // tile) * tile
    rows = max(tile, min(rows, b_aligned))
    # Keep >= 2 grid steps when the batch allows it, so the "parallel" row axis
    # can be sharded across v7x's two TensorCores (no-op on v5e/v6e).
    while rows > tile and pl.cdiv(batch, rows) < 2:
        rows = max(tile, ((rows // 2) // tile) * tile)
    return rows


def init_shuffle(key, num_inputs, dtype=jnp.float32):
    """Equivalent of Shuffle.__init__: fixed random permutation buffers.

    Also precomputes the (D, D) 0/1 permutation matrices once, so forward
    calls only stream cached arrays (no per-call one-hot rebuild in HBM).
    """
    perm = jax.random.permutation(key, num_inputs).astype(jnp.int32)
    inv_perm = jnp.argsort(perm).astype(jnp.int32)
    # P[k, j] = 1 iff k == idx[j]  =>  (x @ P)[:, j] = x[:, idx[j]]
    p_direct = jax.nn.one_hot(perm, num_inputs, axis=0, dtype=dtype)
    p_inverse = jax.nn.one_hot(inv_perm, num_inputs, axis=0, dtype=dtype)
    return {
        "perm": perm,
        "inv_perm": inv_perm,
        "p_direct": p_direct,
        "p_inverse": p_inverse,
    }


def shuffle_forward(params, inputs, cond_inputs=None, mode="direct", *,
                    block_rows=None, force_pallas=False):
    """Pallas equivalent of Shuffle.forward: (shuffled, zeros(B, 1))."""
    del cond_inputs  # unused, as in the PyTorch module
    B, D = inputs.shape
    direct = (mode == "direct")
    idx = params["perm"] if direct else params["inv_perm"]
    logdet = jnp.zeros((B, 1), dtype=jnp.float32)  # constant; produced host-side

    if D < 128 and not force_pallas:
        # Lane-sparse output (< 1 full vreg lane width): a plain XLA gather is
        # strictly better than any Pallas kernel here.
        return jnp.take(inputs, idx, axis=1), logdet

    p_mat = params["p_direct"] if direct else params["p_inverse"]
    if p_mat.dtype != inputs.dtype:
        p_mat = p_mat.astype(inputs.dtype)

    tile_budget, vmem_limit = _device_budgets()
    if block_rows is None:
        block_rows = _pick_block_rows(B, D, inputs.dtype.itemsize, tile_budget)
    grid = (pl.cdiv(B, block_rows),)

    # HIGHEST (bf16x3 emulation) only where exactness of f32 pass-through needs
    # it; bf16 inputs are exact against a 0/1 matrix in a single DEFAULT pass.
    precision = (jax.lax.Precision.HIGHEST if inputs.dtype == jnp.float32
                 else jax.lax.Precision.DEFAULT)

    y = pl.pallas_call(
        functools.partial(_shuffle_kernel, precision=precision),
        out_shape=jax.ShapeDtypeStruct((B, D), inputs.dtype),
        grid_spec=pltpu.PrefetchScalarGridSpec(
            num_scalar_prefetch=0,
            grid=grid,
            in_specs=[
                pl.BlockSpec((block_rows, D), lambda i: (i, 0)),
                pl.BlockSpec((D, D), lambda i: (0, 0)),  # resident permutation matrix
            ],
            out_specs=pl.BlockSpec((block_rows, D), lambda i: (i, 0)),
        ),
        compiler_params=pltpu.CompilerParams(
            dimension_semantics=("parallel",),
            vmem_limit_bytes=vmem_limit,
        ),
    )(inputs, p_mat)
    return y, logdet


if __name__ == "__main__":
    key = jax.random.PRNGKey(0)
    k_perm, k_x, k_perm2, k_x2 = jax.random.split(key, 4)

    # Lane-dense case that exercises the Pallas kernel: batch=64, num_inputs=128.
    B, D = 64, 128
    params = init_shuffle(k_perm, D)
    x = jax.random.normal(k_x, (B, D), dtype=jnp.float32)

    # Direct mode (auto tiling -> >=2 parallel grid steps).
    y, logdet = shuffle_forward(params, x, mode="direct")
    y = jax.block_until_ready(y)
    logdet = jax.block_until_ready(logdet)

    y_ref = jnp.take(x, params["perm"], axis=1)
    assert y.shape == (B, D) and logdet.shape == (B, 1)
    assert jnp.allclose(y, y_ref, atol=1e-6, rtol=1e-6)
    assert jnp.all(logdet == 0.0)

    # Inverse mode must undo the direct shuffle.
    x_rec, logdet_inv = shuffle_forward(params, y, mode="inverse")
    x_rec = jax.block_until_ready(x_rec)
    assert jnp.allclose(x_rec, x, atol=1e-6, rtol=1e-6)
    assert jnp.all(jax.block_until_ready(logdet_inv) == 0.0)

    # bf16 path (DEFAULT precision, 16-row sublane alignment) through the kernel.
    x_bf = x.astype(jnp.bfloat16)
    y_bf, _ = shuffle_forward(params, x_bf, mode="direct")
    y_bf = jax.block_until_ready(y_bf)
    assert jnp.allclose(y_bf.astype(jnp.float32),
                        jnp.take(x_bf, params["perm"], axis=1).astype(jnp.float32))

    # Small-D path (D=32 < 128): dispatches to the XLA gather fallback.
    params_small = init_shuffle(k_perm2, 32)
    x_small = jax.random.normal(k_x2, (16, 32), dtype=jnp.float32)
    y_small, ld_small = shuffle_forward(params_small, x_small, mode="direct")
    y_small = jax.block_until_ready(y_small)
    assert jnp.allclose(y_small, jnp.take(x_small, params_small["perm"], axis=1))
    assert ld_small.shape == (16, 1) and jnp.all(ld_small == 0.0)

    print("KERNEL_OK")
</pallas_src>

<mosaic_0001>
module attributes {stable_mosaic.version = 11 : i64} {
  func.func @_shuffle_kernel(%arg0: i32, %arg1: memref<32x128xf32, #tpu.memory_space<vmem>>, %arg2: memref<128x128xf32, #tpu.memory_space<vmem>>, %arg3: memref<32x128xf32, #tpu.memory_space<vmem>>) attributes {dimension_semantics = [#tpu.dimension_semantics<parallel>], iteration_bounds = array<i64: 2>, scalar_prefetch = 0 : i64, scratch_operands = 0 : i64, tpu.core_type = #tpu.core_type<tc>, window_params = [{transform_indices = @transform_0, window_bounds = array<i64: 32, 128>}, {pipeline_mode = #tpu.pipeline_mode<synchronous>, transform_indices = @transform_1, window_bounds = array<i64: 128, 128>}, {transform_indices = @transform_2, window_bounds = array<i64: 32, 128>}]} {
    %c0 = arith.constant 0 : index
    %c0_0 = arith.constant 0 : index
    %0 = vector.load %arg1[%c0, %c0_0] : memref<32x128xf32, #tpu.memory_space<vmem>>, vector<32x128xf32>
    %c0_1 = arith.constant 0 : index
    %c0_2 = arith.constant 0 : index
    %1 = vector.load %arg2[%c0_1, %c0_2] : memref<128x128xf32, #tpu.memory_space<vmem>>, vector<128x128xf32>
    %cst = arith.constant dense<0.000000e+00> : vector<32x128xf32>
    %2 = tpu.matmul %0, %1, %cst {dimension_numbers = #tpu.dot_dimension_numbers<[1], [0], [0], [1], [0, 0, 1, 1], [], []>, precision = #tpu.contract_precision<fp32>} : vector<32x128xf32>, vector<128x128xf32>, vector<32x128xf32> -> vector<32x128xf32>
    %c0_3 = arith.constant 0 : index
    %c0_4 = arith.constant 0 : index
    %3 = vector.load %arg3[%c0_3, %c0_4] : memref<32x128xf32, #tpu.memory_space<vmem>>, vector<32x128xf32>
    tpu.vector_store %arg3[%c0_3, %c0_4], %2 {strides = array<i32>} : memref<32x128xf32, #tpu.memory_space<vmem>>, vector<32x128xf32>,
    return
  }
  func.func @transform_0(%arg0: i32) -> (i32, i32) {
    %c0_i32 = arith.constant 0 : i32
    %c0_i32_0 = arith.constant 0 : i32
    return %arg0, %c0_i32 : i32, i32
  }
  func.func @transform_1(%arg0: i32) -> (i32, i32) {
    %c0_i32 = arith.constant 0 : i32
    %c0_i32_0 = arith.constant 0 : i32
    %c0_i32_1 = arith.constant 0 : i32
    return %c0_i32, %c0_i32_0 : i32, i32
  }
  func.func @transform_2(%arg0: i32) -> (i32, i32) {
    %c0_i32 = arith.constant 0 : i32
    %c0_i32_0 = arith.constant 0 : i32
    return %arg0, %c0_i32 : i32, i32
  }
}

</mosaic_0001>

<llo_original>
// kernel: tpu_custom_call.1
$region0: #{tpu_custom_call.1}
  #allocation0 [shape = 'u32[]', space=smem, size = 0x4, offset = 0x4, fixed_abs, tag = 'smem constant byte address 0x4 - core index']
  #allocation1 [shape = 'u32[72,128]{1,0:T(1,128)}', space=vmem, size = 0x9000, scoped, tag = 'internal scratch']
  %s0 = inlined_call_operand.hbm [shape: f32[64,128], index: 0, kind: input, shape index: {}]
  %s1 = inlined_call_operand.hbm [shape: f32[128,128], index: 1, kind: input, shape index: {}]
  %s2 = inlined_call_operand.hbm [shape: f32[64,128], index: 2, kind: output, shape index: {}]
  %s3 = sld [smem:[#allocation0]]
  $region49: #{tpu_custom_call.1} parent=0
    _
  %s5 = ssub.s32 1, %s3
  %s6 = scalar_select 0, %s5, %s3
  $region1: #{tpu_custom_call.1} parent=0
    #allocation2 [shape = 'u8[32768]{0}', space=vmem, size = 0x8000, scoped, tag = 'input window, operand 0']
    #allocation3 [shape = 's32[2]{0}', space=sflag, size = 0x8, scoped, tag = 'scoped memory for tpu_custom_call.1']
    #allocation4 [shape = 's32[2]{0}', space=sflag, size = 0x8, scoped, tag = 'scoped memory for tpu_custom_call.1']
    #allocation5 [shape = 'u8[65536]{0}', space=vmem, size = 0x10000, scoped, tag = 'input window, operand 1, single buffered']
    #allocation6 [shape = 's32[1]{0}', space=sflag, size = 0x4, scoped, tag = 'scoped memory for tpu_custom_call.1']
    #allocation7 [shape = 'u8[32768]{0}', space=vmem, size = 0x8000, scoped, tag = 'output window, operand 0']
    %7 = vsyncpa [#allocation3], 0
    %s8 = scalar_lea.sflag [#allocation3], 1
    %9 = vsyncpa %s8, 0
    %10 = vsyncpa [#allocation6], 0
    %11 = vsyncpa [#allocation4], 0
    %s12 = scalar_lea.sflag [#allocation4], 1
    %13 = vsyncpa %s12, 0
    loop: start=0, step=1, limit=4
    $region2: #{tpu_custom_call.1} parent=1 // loop_pre_header
      _
    $region3: #{tpu_custom_call.1} parent=1 // loop_header
      %s15 = sphi 0, %s19
      %p16 = scmp.ge.s32.totalorder %s15, 4
      %s25 = sphi 0, %s27
      %s28 = sphi 0, %s25
      %s29 = sphi 0, %s28
      %s45 = sphi 0, %s29
      %s49 = sphi 0, %s49
      %s51 = sphi 0, %s49
      %s52 = sphi 0, %s51
      %s66 = sphi 0, %s52
      %s72 = sphi 0, %s74
      %s75 = sphi 0, %s72
      %s76 = sphi 0, %s75
      %s92 = sphi 0, %s76
    $region4: #{tpu_custom_call.1} parent=1 // loop_header_branch
      %18 = sbr.rel (%p16) target = $region8
    $region5: #{tpu_custom_call.1} parent=1 // loop_body
      %s20 = ssub.s32 %s15, 1
      %s21 = ssub.s32 %s15, 2
      %s22 = sadd.s32 %s15, 1
      %s23 = ssub.s32 %s15, %s22
      %p24 = scmp.eq.s32.totalorder %s23, 0
      %s26 = sadd.s32 %s25, 1
      %s27 = scalar_select %p24, %s25, %s26
      %p30 = pneg %p24
      %p31 = scmp.eq.s32.totalorder %s15, 1
      %p32 = por %p30, %p31
      %p33 = scmp.ne.s32.totalorder %s25, %s28
      %p34 = scmp.eq.s32.totalorder %s15, 0
      %p35 = por %p33, %p34
      %p36 = scmp.ne.s32.totalorder %s25, %s28
      %p37 = scmp.eq.s32.totalorder %s20, 1
      %p38 = por %p36, %p37
      %p39 = scmp.ne.s32.totalorder %s28, %s29
      %p40 = scmp.eq.s32.totalorder %s20, 0
      %p41 = por %p39, %p40
      %p42 = scmp.ne.s32.totalorder %s28, %s29
      %p43 = scmp.eq.s32.totalorder %s21, 1
      %p44 = por %p42, %p43
      %p46 = scmp.ne.s32.totalorder %s29, %s45
      %p47 = scmp.eq.s32.totalorder %s21, 0
      %p48 = por %p46, %p47
      %s50 = sadd.s32 %s49, 1
      %p53 = scmp.eq.s32.totalorder %s15, 1
      %p54 = scmp.ne.s32.totalorder %s49, %s51
      %p55 = scmp.eq.s32.totalorder %s15, 0
      %p56 = por %p54, %p55
      %p57 = scmp.ne.s32.totalorder %s49, %s51
      %p58 = scmp.eq.s32.totalorder %s20, 1
      %p59 = por %p57, %p58
      %p60 = scmp.ne.s32.totalorder %s51, %s52
      %p61 = scmp.eq.s32.totalorder %s20, 0
      %p62 = por %p60, %p61
      %p63 = scmp.ne.s32.totalorder %s51, %s52
      %p64 = scmp.eq.s32.totalorder %s21, 1
      %p65 = por %p63, %p64
      %p67 = scmp.ne.s32.totalorder %s52, %s66
      %p68 = scmp.eq.s32.totalorder %s21, 0
      %p69 = por %p67, %p68
      %s70 = ssub.s32 %s15, %s22
      %p71 = scmp.eq.s32.totalorder %s70, 0
      %s73 = sadd.s32 %s72, 1
      %s74 = scalar_select %p71, %s72, %s73
      %p77 = pneg %p71
      %p78 = scmp.eq.s32.totalorder %s15, 1
      %p79 = por %p77, %p78
      %p80 = scmp.ne.s32.totalorder %s72, %s75
      %p81 = scmp.eq.s32.totalorder %s15, 0
      %p82 = por %p80, %p81
      %p83 = scmp.ne.s32.totalorder %s72, %s75
      %p84 = scmp.eq.s32.totalorder %s20, 1
      %p85 = por %p83, %p84
      %p86 = scmp.ne.s32.totalorder %s75, %s76
      %p87 = scmp.eq.s32.totalorder %s20, 0
      %p88 = por %p86, %p87
      %p89 = scmp.ne.s32.totalorder %s75, %s76
      %p90 = scmp.eq.s32.totalorder %s21, 1
      %p91 = por %p89, %p90
      %p93 = scmp.ne.s32.totalorder %s76, %s92
      %p94 = scmp.eq.s32.totalorder %s21, 0
      %p95 = por %p93, %p94
      %p96 = scmp.le.s32.totalorder 1, %s15
      %p97 = scmp.lt.s32.totalorder %s15, 3
      %p98 = pnand %p96, %p97
      %p99 = pneg %p98
      // Predicated region
      $region9: #{tpu_custom_call.1} parent=5 // pred_check
        _
      $region10: #{tpu_custom_call.1} parent=5 // pred_check_branch
        %101 = sbr.rel (%p98) target = $region12
      $region11: #{tpu_custom_call.1} parent=5 // pred_region
        %s102 = ssub.s32 %s15, 1
        // Predicated region
        $region13: #{tpu_custom_call.1} parent=11 // pred_check
          %p103 = pneg %p62
        $region14: #{tpu_custom_call.1} parent=11 // pred_check_branch
          %105 = sbr.rel (%p103) target = $region16
        $region15: #{tpu_custom_call.1} parent=11 // pred_region
          %107 = vsyncadd [#allocation6], 0
          %s108 = sshll.u32 %s1, 4
          %s109 = int_to_ptr.hbm [resolvable:$true] %s108
          %s110 = sshll.u32 [#allocation5], 4
          %s111 = int_to_ptr.vmem [resolvable:$true] %s110
          %116 = dma.hbm_to_vmem [thread:$0]  %s109, 2048, %s111, [#allocation6], 128, 128, 8
        $region16: #{tpu_custom_call.1} parent=11 // pred_fallthru
          _
      $region12: #{tpu_custom_call.1} parent=5 // pred_fallthru
        _
      %p117 = scmp.lt.s32.totalorder %s15, 2
      // Predicated region
      $region17: #{tpu_custom_call.1} parent=5 // pred_check
        %p118 = pneg %p117
      $region18: #{tpu_custom_call.1} parent=5 // pred_check_branch
        %120 = sbr.rel (%p118) target = $region20
      $region19: #{tpu_custom_call.1} parent=5 // pred_region
        // Predicated region
        $region21: #{tpu_custom_call.1} parent=19 // pred_check
          %p121 = pneg %p35
        $region22: #{tpu_custom_call.1} parent=19 // pred_check_branch
          %123 = sbr.rel (%p121) target = $region24
        $region23: #{tpu_custom_call.1} parent=19 // pred_region
          %s124 = sand.u32 %s25, 1
          %s125 = scalar_lea.sflag [#allocation3], %s124
          %s126 = sand.u32 %s25, 1
          %s127 = smul.addr %s126, 32
          %s128 = scalar_lea.vmem [#allocation2], %s127
          %s129 = smul.u32 4, %s15
          %131 = vsyncadd %s125, 0
          %s132 = smul.addr %s129, 8
          %s133 = scalar_lea.hbm %s0, %s132
          %s134 = sshll.u32 %s133, 4
          %s135 = int_to_ptr.hbm [resolvable:$true] %s134
          %s136 = sshll.u32 %s128, 4
          %s137 = int_to_ptr.vmem [resolvable:$true] %s136
          %142 = dma.hbm_to_vmem [thread:$0]  %s135, 512, %s137, %s125, 128, 128, 8
        $region24: #{tpu_custom_call.1} parent=19 // pred_fallthru
          _
      $region20: #{tpu_custom_call.1} parent=5 // pred_fallthru
        _
      %p143 = scmp.le.s32.totalorder 1, %s15
      %p144 = scmp.lt.s32.totalorder %s15, 3
      %p145 = pnand %p143, %p144
      %p146 = pneg %p145
      // Predicated region
      $region25: #{tpu_custom_call.1} parent=5 // pred_check
        _
      $region26: #{tpu_custom_call.1} parent=5 // pred_check_branch
        %148 = sbr.rel (%p145) target = $region28
      $region27: #{tpu_custom_call.1} parent=5 // pred_region
        %s149 = ssub.s32 %s15, 1
        %s150 = sand.u32 %s28, 1
        %s151 = scalar_lea.sflag [#allocation3], %s150
        %s152 = sand.u32 %s28, 1
        %s153 = smul.addr %s152, 32
        %s154 = scalar_lea.vmem [#allocation2], %s153
        // Predicated region
        $region29: #{tpu_custom_call.1} parent=27 // pred_check
          %p155 = pneg %p41
        $region30: #{tpu_custom_call.1} parent=27 // pred_check_branch
          %157 = sbr.rel (%p155) target = $region32
        $region31: #{tpu_custom_call.1} parent=27 // pred_region
          %159 = dma.done %s151, 512
        $region32: #{tpu_custom_call.1} parent=27 // pred_fallthru
          _
        // Predicated region
        $region33: #{tpu_custom_call.1} parent=27 // pred_check
          %p160 = pneg %p62
        $region34: #{tpu_custom_call.1} parent=27 // pred_check_branch
          %162 = sbr.rel (%p160) target = $region36
        $region35: #{tpu_custom_call.1} parent=27 // pred_region
          %164 = dma.done [#allocation6], 2048
        $region36: #{tpu_custom_call.1} parent=27 // pred_fallthru
          _
        %s165 = sand.u32 %s28, 1
        %s166 = scalar_lea.sflag [#allocation3], %s165
        %s167 = sand.u32 %s28, 1
        %s168 = smul.addr %s167, 32
        %s169 = scalar_lea.vmem [#allocation2], %s168
        %p170 = pneg %p41
        %p171 = pneg %p38
        %p172 = pneg %p62
        %p173 = pneg %p59
        %p174 = pneg %p88
        %p175 = pneg %p85
        %s176 = sand.u32 %s75, 1
        %s177 = scalar_lea.sflag [#allocation4], %s176
        %s178 = sand.u32 %s75, 1
        %s179 = smul.addr %s178, 32
        %s180 = scalar_lea.vmem [#allocation7], %s179
        %s181 = smul.u32 4, %s20
        %s182 = smul.u32 4, %s20
        %v183 = vld [vmem:[%s154] sm:$0xff]
        %v184 = vld [vmem:[%s154 + $0x8] sm:$0xff]
        %v185 = vld [vmem:[%s154 + $0x10] sm:$0xff]
        %v186 = vld [vmem:[%s154 + $0x18] sm:$0xff]
        %v187 = vld [vmem:[#allocation5] sm:$0xff]
        %v188 = vld [vmem:[#allocation5 + $0x8] sm:$0xff]
        %v189 = vld [vmem:[#allocation5 + $0x10] sm:$0xff]
        %v190 = vld [vmem:[#allocation5 + $0x18] sm:$0xff]
        %v191 = vld [vmem:[#allocation5 + $0x20] sm:$0xff]
        %v192 = vld [vmem:[#allocation5 + $0x28] sm:$0xff]
        %v193 = vld [vmem:[#allocation5 + $0x30] sm:$0xff]
        %v194 = vld [vmem:[#allocation5 + $0x38] sm:$0xff]
        %v195 = vld [vmem:[#allocation5 + $0x40] sm:$0xff]
        %v196 = vld [vmem:[#allocation5 + $0x48] sm:$0xff]
        %v197 = vld [vmem:[#allocation5 + $0x50] sm:$0xff]
        %v198 = vld [vmem:[#allocation5 + $0x58] sm:$0xff]
        %v199 = vld [vmem:[#allocation5 + $0x60] sm:$0xff]
        %v200 = vld [vmem:[#allocation5 + $0x68] sm:$0xff]
        %v201 = vld [vmem:[#allocation5 + $0x70] sm:$0xff]
        %v202 = vld [vmem:[#allocation5 + $0x78] sm:$0xff]
        %v203 = vand.u32 %v202, 4294901760
        %204 = vmatpush.msra.mxu0 %v203
        %v205 = vand.u32 %v201, 4294901760
        %206 = vmatpush.msra.mxu0 %v205
        %v207 = vand.u32 %v200, 4294901760
        %208 = vmatpush.msra.mxu0 %v207
        %v209 = vand.u32 %v199, 4294901760
        %210 = vmatpush.msra.mxu0 %v209
        %v211 = vand.u32 %v198, 4294901760
        %212 = vmatpush.msra.mxu0 %v211
        %v213 = vand.u32 %v197, 4294901760
        %214 = vmatpush.msra.mxu0 %v213
        %v215 = vand.u32 %v196, 4294901760
        %216 = vmatpush.msra.mxu0 %v215
        %v217 = vand.u32 %v195, 4294901760
        %218 = vmatpush.msra.mxu0 %v217
        %v219 = vand.u32 %v194, 4294901760
        %220 = vmatpush.msra.mxu0 %v219
        %v221 = vand.u32 %v193, 4294901760
        %222 = vmatpush.msra.mxu0 %v221
        %v223 = vand.u32 %v192, 4294901760
        %224 = vmatpush.msra.mxu0 %v223
        %v225 = vand.u32 %v191, 4294901760
        %226 = vmatpush.msra.mxu0 %v225
        %v227 = vand.u32 %v190, 4294901760
        %228 = vmatpush.msra.mxu0 %v227
        %v229 = vand.u32 %v189, 4294901760
        %230 = vmatpush.msra.mxu0 %v229
        %v231 = vand.u32 %v188, 4294901760
        %232 = vmatpush.msra.mxu0 %v231
        %v233 = vand.u32 %v187, 4294901760
        %234 = vmatpush.msra.mxu0 %v233
        %v235 = vand.u32 %v183, 4294901760
        %v236 = vsub.f32 %v183, %v235
        %v237 = vand.u32 %v236, 4294901760
        %v238 = vsub.f32 %v236, %v237
        %v239 = vand.u32 %v238, 4294901760
        %240 = vmatmul.f32.gmra.mxu0 %v239
        %v241 = vpop.f32.mrf.mxu0
        %v242 = vadd.f32 0.0, %v241
        %v243 = vand.u32 %v184, 4294901760
        %v244 = vsub.f32 %v184, %v243
        %v245 = vand.u32 %v244, 4294901760
        %v246 = vsub.f32 %v244, %v245
        %v247 = vand.u32 %v246, 4294901760
        %248 = vmatmul.f32.gmra.mxu0 %v247
        %v249 = vpop.f32.mrf.mxu0
        %v250 = vadd.f32 0.0, %v249
        %v251 = vand.u32 %v185, 4294901760
        %v252 = vsub.f32 %v185, %v251
        %v253 = vand.u32 %v252, 4294901760
        %v254 = vsub.f32 %v252, %v253
        %v255 = vand.u32 %v254, 4294901760
        %256 = vmatmul.f32.gmra.mxu0 %v255
        %v257 = vpop.f32.mrf.mxu0
        %v258 = vadd.f32 0.0, %v257
        %v259 = vand.u32 %v186, 4294901760
        %v260 = vsub.f32 %v186, %v259
        %v261 = vand.u32 %v260, 4294901760
        %v262 = vsub.f32 %v260, %v261
        %v263 = vand.u32 %v262, 4294901760
        %264 = vmatmul.f32.gmra.mxu0 %v263
        %v265 = vpop.f32.mrf.mxu0
        %v266 = vadd.f32 0.0, %v265
        %267 = vdwg.mxu0
        %v268 = vand.u32 %v202, 4294901760
        %v269 = vsub.f32 %v202, %v268
        %v270 = vand.u32 %v269, 4294901760
        %v271 = vsub.f32 %v269, %v270
        %v272 = vand.u32 %v271, 4294901760
        %273 = vmatpush.msra.mxu0 %v272
        %v274 = vand.u32 %v201, 4294901760
        %v275 = vsub.f32 %v201, %v274
        %v276 = vand.u32 %v275, 4294901760
        %v277 = vsub.f32 %v275, %v276
        %v278 = vand.u32 %v277, 4294901760
        %279 = vmatpush.msra.mxu0 %v278
        %v280 = vand.u32 %v200, 4294901760
        %v281 = vsub.f32 %v200, %v280
        %v282 = vand.u32 %v281, 4294901760
        %v283 = vsub.f32 %v281, %v282
        %v284 = vand.u32 %v283, 4294901760
        %285 = vmatpush.msra.mxu0 %v284
        %v286 = vand.u32 %v199, 4294901760
        %v287 = vsub.f32 %v199, %v286
        %v288 = vand.u32 %v287, 4294901760
        %v289 = vsub.f32 %v287, %v288
        %v290 = vand.u32 %v289, 4294901760
        %291 = vmatpush.msra.mxu0 %v290
        %v292 = vand.u32 %v198, 4294901760
        %v293 = vsub.f32 %v198, %v292
        %v294 = vand.u32 %v293, 4294901760
        %v295 = vsub.f32 %v293, %v294
        %v296 = vand.u32 %v295, 4294901760
        %297 = vmatpush.msra.mxu0 %v296
        %v298 = vand.u32 %v197, 4294901760
        %v299 = vsub.f32 %v197, %v298
        %v300 = vand.u32 %v299, 4294901760
        %v301 = vsub.f32 %v299, %v300
        %v302 = vand.u32 %v301, 4294901760
        %303 = vmatpush.msra.mxu0 %v302
        %v304 = vand.u32 %v196, 4294901760
        %v305 = vsub.f32 %v196, %v304
        %v306 = vand.u32 %v305, 4294901760
        %v307 = vsub.f32 %v305, %v306
        %v308 = vand.u32 %v307, 4294901760
        %309 = vmatpush.msra.mxu0 %v308
        %v310 = vand.u32 %v195, 4294901760
        %v311 = vsub.f32 %v195, %v310
        %v312 = vand.u32 %v311, 4294901760
        %v313 = vsub.f32 %v311, %v312
        %v314 = vand.u32 %v313, 4294901760
        %315 = vmatpush.msra.mxu0 %v314
        %v316 = vand.u32 %v194, 4294901760
        %v317 = vsub.f32 %v194, %v316
        %v318 = vand.u32 %v317, 4294901760
        %v319 = vsub.f32 %v317, %v318
        %v320 = vand.u32 %v319, 4294901760
        %321 = vmatpush.msra.mxu0 %v320
        %v322 = vand.u32 %v193, 4294901760
        %v323 = vsub.f32 %v193, %v322
        %v324 = vand.u32 %v323, 4294901760
        %v325 = vsub.f32 %v323, %v324
        %v326 = vand.u32 %v325, 4294901760
        %327 = vmatpush.msra.mxu0 %v326
        %v328 = vand.u32 %v192, 4294901760
        %v329 = vsub.f32 %v192, %v328
        %v330 = vand.u32 %v329, 4294901760
        %v331 = vsub.f32 %v329, %v330
        %v332 = vand.u32 %v331, 4294901760
        %333 = vmatpush.msra.mxu0 %v332
        %v334 = vand.u32 %v191, 4294901760
        %v335 = vsub.f32 %v191, %v334
        %v336 = vand.u32 %v335, 4294901760
        %v337 = vsub.f32 %v335, %v336
        %v338 = vand.u32 %v337, 4294901760
        %339 = vmatpush.msra.mxu0 %v338
        %v340 = vand.u32 %v190, 4294901760
        %v341 = vsub.f32 %v190, %v340
        %v342 = vand.u32 %v341, 4294901760
        %v343 = vsub.f32 %v341, %v342
        %v344 = vand.u32 %v343, 4294901760
        %345 = vmatpush.msra.mxu0 %v344
        %v346 = vand.u32 %v189, 4294901760
        %v347 = vsub.f32 %v189, %v346
        %v348 = vand.u32 %v347, 4294901760
        %v349 = vsub.f32 %v347, %v348
        %v350 = vand.u32 %v349, 4294901760
        %351 = vmatpush.msra.mxu0 %v350
        %v352 = vand.u32 %v188, 4294901760
        %v353 = vsub.f32 %v188, %v352
        %v354 = vand.u32 %v353, 4294901760
        %v355 = vsub.f32 %v353, %v354
        %v356 = vand.u32 %v355, 4294901760
        %357 = vmatpush.msra.mxu0 %v356
        %v358 = vand.u32 %v187, 4294901760
        %v359 = vsub.f32 %v187, %v358
        %v360 = vand.u32 %v359, 4294901760
        %v361 = vsub.f32 %v359, %v360
        %v362 = vand.u32 %v361, 4294901760
        %363 = vmatpush.msra.mxu0 %v362
        %v364 = vand.u32 %v183, 4294901760
        %365 = vmatmul.f32.gmra.mxu0 %v364
        %v366 = vpop.f32.mrf.mxu0
        %v367 = vadd.f32 %v242, %v366
        %v368 = vand.u32 %v184, 4294901760
        %369 = vmatmul.f32.gmra.mxu0 %v368
        %v370 = vpop.f32.mrf.mxu0
        %v371 = vadd.f32 %v250, %v370
        %v372 = vand.u32 %v185, 4294901760
        %373 = vmatmul.f32.gmra.mxu0 %v372
        %v374 = vpop.f32.mrf.mxu0
        %v375 = vadd.f32 %v258, %v374
        %v376 = vand.u32 %v186, 4294901760
        %377 = vmatmul.f32.gmra.mxu0 %v376
        %v378 = vpop.f32.mrf.mxu0
        %v379 = vadd.f32 %v266, %v378
        %380 = vdwg.mxu0
        %v381 = vand.u32 %v202, 4294901760
        %v382 = vsub.f32 %v202, %v381
        %383 = vmatpush.msra.mxu0 %v382
        %v384 = vand.u32 %v201, 4294901760
        %v385 = vsub.f32 %v201, %v384
        %386 = vmatpush.msra.mxu0 %v385
        %v387 = vand.u32 %v200, 4294901760
        %v388 = vsub.f32 %v200, %v387
        %389 = vmatpush.msra.mxu0 %v388
        %v390 = vand.u32 %v199, 4294901760
        %v391 = vsub.f32 %v199, %v390
        %392 = vmatpush.msra.mxu0 %v391
        %v393 = vand.u32 %v198, 4294901760
        %v394 = vsub.f32 %v198, %v393
        %395 = vmatpush.msra.mxu0 %v394
        %v396 = vand.u32 %v197, 4294901760
        %v397 = vsub.f32 %v197, %v396
        %398 = vmatpush.msra.mxu0 %v397
        %v399 = vand.u32 %v196, 4294901760
        %v400 = vsub.f32 %v196, %v399
        %401 = vmatpush.msra.mxu0 %v400
        %v402 = vand.u32 %v195, 4294901760
        %v403 = vsub.f32 %v195, %v402
        %404 = vmatpush.msra.mxu0 %v403
        %v405 = vand.u32 %v194, 4294901760
        %v406 = vsub.f32 %v194, %v405
        %407 = vmatpush.msra.mxu0 %v406
        %v408 = vand.u32 %v193, 4294901760
        %v409 = vsub.f32 %v193, %v408
        %410 = vmatpush.msra.mxu0 %v409
        %v411 = vand.u32 %v192, 4294901760
        %v412 = vsub.f32 %v192, %v411
        %413 = vmatpush.msra.mxu0 %v412
        %v414 = vand.u32 %v191, 4294901760
        %v415 = vsub.f32 %v191, %v414
        %416 = vmatpush.msra.mxu0 %v415
        %v417 = vand.u32 %v190, 4294901760
        %v418 = vsub.f32 %v190, %v417
        %419 = vmatpush.msra.mxu0 %v418
        %v420 = vand.u32 %v189, 4294901760
        %v421 = vsub.f32 %v189, %v420
        %422 = vmatpush.msra.mxu0 %v421
        %v423 = vand.u32 %v188, 4294901760
        %v424 = vsub.f32 %v188, %v423
        %425 = vmatpush.msra.mxu0 %v424
        %v426 = vand.u32 %v187, 4294901760
        %v427 = vsub.f32 %v187, %v426
        %428 = vmatpush.msra.mxu0 %v427
        %v429 = vand.u32 %v183, 4294901760
        %v430 = vsub.f32 %v183, %v429
        %431 = vmatmul.f32.gmra.mxu0 %v430
        %v432 = vpop.f32.mrf.mxu0
        %v433 = vadd.f32 %v367, %v432
        %v434 = vand.u32 %v184, 4294901760
        %v435 = vsub.f32 %v184, %v434
        %436 = vmatmul.f32.gmra.mxu0 %v435
        %v437 = vpop.f32.mrf.mxu0
        %v438 = vadd.f32 %v371, %v437
        %v439 = vand.u32 %v185, 4294901760
        %v440 = vsub.f32 %v185, %v439
        %441 = vmatmul.f32.gmra.mxu0 %v440
        %v442 = vpop.f32.mrf.mxu0
        %v443 = vadd.f32 %v375, %v442
        %v444 = vand.u32 %v186, 4294901760
        %v445 = vsub.f32 %v186, %v444
        %446 = vmatmul.f32.gmra.mxu0 %v445
        %v447 = vpop.f32.mrf.mxu0
        %v448 = vadd.f32 %v379, %v447
        %449 = vdwg.mxu0
        %v450 = vand.u32 %v202, 4294901760
        %451 = vmatpush.msra.mxu0 %v450
        %v452 = vand.u32 %v201, 4294901760
        %453 = vmatpush.msra.mxu0 %v452
        %v454 = vand.u32 %v200, 4294901760
        %455 = vmatpush.msra.mxu0 %v454
        %v456 = vand.u32 %v199, 4294901760
        %457 = vmatpush.msra.mxu0 %v456
        %v458 = vand.u32 %v198, 4294901760
        %459 = vmatpush.msra.mxu0 %v458
        %v460 = vand.u32 %v197, 4294901760
        %461 = vmatpush.msra.mxu0 %v460
        %v462 = vand.u32 %v196, 4294901760
        %463 = vmatpush.msra.mxu0 %v462
        %v464 = vand.u32 %v195, 4294901760
        %465 = vmatpush.msra.mxu0 %v464
        %v466 = vand.u32 %v194, 4294901760
        %467 = vmatpush.msra.mxu0 %v466
        %v468 = vand.u32 %v193, 4294901760
        %469 = vmatpush.msra.mxu0 %v468
        %v470 = vand.u32 %v192, 4294901760
        %471 = vmatpush.msra.mxu0 %v470
        %v472 = vand.u32 %v191, 4294901760
        %473 = vmatpush.msra.mxu0 %v472
        %v474 = vand.u32 %v190, 4294901760
        %475 = vmatpush.msra.mxu0 %v474
        %v476 = vand.u32 %v189, 4294901760
        %477 = vmatpush.msra.mxu0 %v476
        %v478 = vand.u32 %v188, 4294901760
        %479 = vmatpush.msra.mxu0 %v478
        %v480 = vand.u32 %v187, 4294901760
        %481 = vmatpush.msra.mxu0 %v480
        %v482 = vand.u32 %v183, 4294901760
        %v483 = vsub.f32 %v183, %v482
        %v484 = vand.u32 %v483, 4294901760
        %485 = vmatmul.f32.gmra.mxu0 %v484
        %v486 = vpop.f32.mrf.mxu0
        %v487 = vadd.f32 %v433, %v486
        %v488 = vand.u32 %v184, 4294901760
        %v489 = vsub.f32 %v184, %v488
        %v490 = vand.u32 %v489, 4294901760
        %491 = vmatmul.f32.gmra.mxu0 %v490
        %v492 = vpop.f32.mrf.mxu0
        %v493 = vadd.f32 %v438, %v492
        %v494 = vand.u32 %v185, 4294901760
        %v495 = vsub.f32 %v185, %v494
        %v496 = vand.u32 %v495, 4294901760
        %497 = vmatmul.f32.gmra.mxu0 %v496
        %v498 = vpop.f32.mrf.mxu0
        %v499 = vadd.f32 %v443, %v498
        %v500 = vand.u32 %v186, 4294901760
        %v501 = vsub.f32 %v186, %v500
        %v502 = vand.u32 %v501, 4294901760
        %503 = vmatmul.f32.gmra.mxu0 %v502
        %v504 = vpop.f32.mrf.mxu0
        %v505 = vadd.f32 %v448, %v504
        %506 = vdwg.mxu0
        %v507 = vand.u32 %v202, 4294901760
        %v508 = vsub.f32 %v202, %v507
        %v509 = vand.u32 %v508, 4294901760
        %510 = vmatpush.msra.mxu0 %v509
        %v511 = vand.u32 %v201, 4294901760
        %v512 = vsub.f32 %v201, %v511
        %v513 = vand.u32 %v512, 4294901760
        %514 = vmatpush.msra.mxu0 %v513
        %v515 = vand.u32 %v200, 4294901760
        %v516 = vsub.f32 %v200, %v515
        %v517 = vand.u32 %v516, 4294901760
        %518 = vmatpush.msra.mxu0 %v517
        %v519 = vand.u32 %v199, 4294901760
        %v520 = vsub.f32 %v199, %v519
        %v521 = vand.u32 %v520, 4294901760
        %522 = vmatpush.msra.mxu0 %v521
        %v523 = vand.u32 %v198, 4294901760
        %v524 = vsub.f32 %v198, %v523
        %v525 = vand.u32 %v524, 4294901760
        %526 = vmatpush.msra.mxu0 %v525
        %v527 = vand.u32 %v197, 4294901760
        %v528 = vsub.f32 %v197, %v527
        %v529 = vand.u32 %v528, 4294901760
        %530 = vmatpush.msra.mxu0 %v529
        %v531 = vand.u32 %v196, 4294901760
        %v532 = vsub.f32 %v196, %v531
        %v533 = vand.u32 %v532, 4294901760
        %534 = vmatpush.msra.mxu0 %v533
        %v535 = vand.u32 %v195, 4294901760
        %v536 = vsub.f32 %v195, %v535
        %v537 = vand.u32 %v536, 4294901760
        %538 = vmatpush.msra.mxu0 %v537
        %v539 = vand.u32 %v194, 4294901760
        %v540 = vsub.f32 %v194, %v539
        %v541 = vand.u32 %v540, 4294901760
        %542 = vmatpush.msra.mxu0 %v541
        %v543 = vand.u32 %v193, 4294901760
        %v544 = vsub.f32 %v193, %v543
        %v545 = vand.u32 %v544, 4294901760
        %546 = vmatpush.msra.mxu0 %v545
        %v547 = vand.u32 %v192, 4294901760
        %v548 = vsub.f32 %v192, %v547
        %v549 = vand.u32 %v548, 4294901760
        %550 = vmatpush.msra.mxu0 %v549
        %v551 = vand.u32 %v191, 4294901760
        %v552 = vsub.f32 %v191, %v551
        %v553 = vand.u32 %v552, 4294901760
        %554 = vmatpush.msra.mxu0 %v553
        %v555 = vand.u32 %v190, 4294901760
        %v556 = vsub.f32 %v190, %v555
        %v557 = vand.u32 %v556, 4294901760
        %558 = vmatpush.msra.mxu0 %v557
        %v559 = vand.u32 %v189, 4294901760
        %v560 = vsub.f32 %v189, %v559
        %v561 = vand.u32 %v560, 4294901760
        %562 = vmatpush.msra.mxu0 %v561
        %v563 = vand.u32 %v188, 4294901760
        %v564 = vsub.f32 %v188, %v563
        %v565 = vand.u32 %v564, 4294901760
        %566 = vmatpush.msra.mxu0 %v565
        %v567 = vand.u32 %v187, 4294901760
        %v568 = vsub.f32 %v187, %v567
        %v569 = vand.u32 %v568, 4294901760
        %570 = vmatpush.msra.mxu0 %v569
        %v571 = vand.u32 %v183, 4294901760
        %572 = vmatmul.f32.gmra.mxu0 %v571
        %v573 = vpop.f32.mrf.mxu0
        %v574 = vadd.f32 %v487, %v573
        %v575 = vand.u32 %v184, 4294901760
        %576 = vmatmul.f32.gmra.mxu0 %v575
        %v577 = vpop.f32.mrf.mxu0
        %v578 = vadd.f32 %v493, %v577
        %v579 = vand.u32 %v185, 4294901760
        %580 = vmatmul.f32.gmra.mxu0 %v579
        %v581 = vpop.f32.mrf.mxu0
        %v582 = vadd.f32 %v499, %v581
        %v583 = vand.u32 %v186, 4294901760
        %584 = vmatmul.f32.gmra.mxu0 %v583
        %v585 = vpop.f32.mrf.mxu0
        %v586 = vadd.f32 %v505, %v585
        %587 = vdwg.mxu0
        %v588 = vand.u32 %v202, 4294901760
        %589 = vmatpush.msra.mxu0 %v588
        %v590 = vand.u32 %v201, 4294901760
        %591 = vmatpush.msra.mxu0 %v590
        %v592 = vand.u32 %v200, 4294901760
        %593 = vmatpush.msra.mxu0 %v592
        %v594 = vand.u32 %v199, 4294901760
        %595 = vmatpush.msra.mxu0 %v594
        %v596 = vand.u32 %v198, 4294901760
        %597 = vmatpush.msra.mxu0 %v596
        %v598 = vand.u32 %v197, 4294901760
        %599 = vmatpush.msra.mxu0 %v598
        %v600 = vand.u32 %v196, 4294901760
        %601 = vmatpush.msra.mxu0 %v600
        %v602 = vand.u32 %v195, 4294901760
        %603 = vmatpush.msra.mxu0 %v602
        %v604 = vand.u32 %v194, 4294901760
        %605 = vmatpush.msra.mxu0 %v604
        %v606 = vand.u32 %v193, 4294901760
        %607 = vmatpush.msra.mxu0 %v606
        %v608 = vand.u32 %v192, 4294901760
        %609 = vmatpush.msra.mxu0 %v608
        %v610 = vand.u32 %v191, 4294901760
        %611 = vmatpush.msra.mxu0 %v610
        %v612 = vand.u32 %v190, 4294901760
        %613 = vmatpush.msra.mxu0 %v612
        %v614 = vand.u32 %v189, 4294901760
        %615 = vmatpush.msra.mxu0 %v614
        %v616 = vand.u32 %v188, 4294901760
        %617 = vmatpush.msra.mxu0 %v616
        %v618 = vand.u32 %v187, 4294901760
        %619 = vmatpush.msra.mxu0 %v618
        %v620 = vand.u32 %v183, 4294901760
        %621 = vmatmul.f32.gmra.mxu0 %v620
        %v622 = vpop.f32.mrf.mxu0
        %v623 = vadd.f32 %v574, %v622
        %v624 = vand.u32 %v184, 4294901760
        %625 = vmatmul.f32.gmra.mxu0 %v624
        %v626 = vpop.f32.mrf.mxu0
        %v627 = vadd.f32 %v578, %v626
        %v628 = vand.u32 %v185, 4294901760
        %629 = vmatmul.f32.gmra.mxu0 %v628
        %v630 = vpop.f32.mrf.mxu0
        %v631 = vadd.f32 %v582, %v630
        %v632 = vand.u32 %v186, 4294901760
        %633 = vmatmul.f32.gmra.mxu0 %v632
        %v634 = vpop.f32.mrf.mxu0
        %v635 = vadd.f32 %v586, %v634
        %636 = vdwg.mxu0
        %637 = vst [vmem:[%s180] sm:$0xff] %v623
        %638 = vst [vmem:[%s180 + $0x8] sm:$0xff] %v627
        %639 = vst [vmem:[%s180 + $0x10] sm:$0xff] %v631
        %640 = vst [vmem:[%s180 + $0x18] sm:$0xff] %v635
        %s641 = sand.u32 %s75, 1
        %s642 = scalar_lea.sflag [#allocation4], %s641
        %s643 = sand.u32 %s75, 1
        %s644 = smul.addr %s643, 32
        %s645 = scalar_lea.vmem [#allocation7], %s644
        // Predicated region
        $region37: #{tpu_custom_call.1} parent=27 // pred_check
          %p646 = pneg %p85
        $region38: #{tpu_custom_call.1} parent=27 // pred_check_branch
          %648 = sbr.rel (%p646) target = $region40
        $region39: #{tpu_custom_call.1} parent=27 // pred_region
          %s649 = smul.u32 4, %s20
          %651 = vsyncadd %s642, 0
          %s652 = smul.addr %s649, 8
          %s653 = scalar_lea.hbm %s2, %s652
          %s654 = sshll.u32 %s645, 4
          %s655 = int_to_ptr.vmem [resolvable:$true] %s654
          %s656 = sshll.u32 %s653, 4
          %s657 = int_to_ptr.hbm [resolvable:$true] %s656
          %662 = dma.vmem_to_hbm [thread:$0]  %s655, 512, %s657, %s642, 128, 128, 8
        $region40: #{tpu_custom_call.1} parent=27 // pred_fallthru
          _
      $region28: #{tpu_custom_call.1} parent=5 // pred_fallthru
        _
      %p663 = scmp.le.s32.totalorder 2, %s15
      // Predicated region
      $region41: #{tpu_custom_call.1} parent=5 // pred_check
        %p664 = pneg %p663
      $region42: #{tpu_custom_call.1} parent=5 // pred_check_branch
        %666 = sbr.rel (%p664) target = $region44
      $region43: #{tpu_custom_call.1} parent=5 // pred_region
        %s667 = ssub.s32 %s15, 2
        // Predicated region
        $region45: #{tpu_custom_call.1} parent=43 // pred_check
          %p668 = pneg %p91
        $region46: #{tpu_custom_call.1} parent=43 // pred_check_branch
          %670 = sbr.rel (%p668) target = $region48
        $region47: #{tpu_custom_call.1} parent=43 // pred_region
          %s671 = sand.u32 %s76, 1
          %s672 = scalar_lea.sflag [#allocation4], %s671
          %s673 = sand.u32 %s76, 1
          %s674 = smul.addr %s673, 32
          %s675 = scalar_lea.vmem [#allocation7], %s674
          %677 = dma.done %s672, 512
        $region48: #{tpu_custom_call.1} parent=43 // pred_fallthru
          _
      $region44: #{tpu_custom_call.1} parent=5 // pred_fallthru
        _
    $region6: #{tpu_custom_call.1} parent=1 // loop_footer
      %s19 = sadd.s32 1, %s15
    $region7: #{tpu_custom_call.1} parent=1 // loop_footer_branch
      %14 = sbr.rel target = $region3
    $region8: #{tpu_custom_call.1} parent=1 // loop_exit
      _
    %678 = vsyncpa [#allocation3], 1
    %s679 = scalar_lea.sflag [#allocation3], 1
    %680 = vsyncpa %s679, 1
    %681 = vsyncpa [#allocation6], 1
    %682 = vsyncpa [#allocation4], 1
    %s683 = scalar_lea.sflag [#allocation4], 1
    %684 = vsyncpa %s683, 1

</llo_original>
